<compile_context>
chip_gen: v7x
topology: tpu7x:2x2x1
jax: 0.10.0
libtpu: 0.0.40
codegen_flags: <defaults>
</compile_context>

<pallas_src>
import functools

import jax
import jax.numpy as jnp
from jax import lax
from jax.experimental import pallas as pl
from jax.experimental.pallas import tpu as pltpu


def _sft_kernel(xf_ref, w_ref, b_ref, o_ref, *, nb, H, W):
    # xf_ref: (nb, C, (H+2)*W + 2)  H-padded, flattened input (+1 guard each end)
    # w_ref : (2C, 9C)              fused [scale; shift] weights, cols (ky,kx,ci)
    # b_ref : (2C, 1)               fused biases
    # o_ref : (nb, C, H*W)
    C = o_ref.shape[1]
    HW = H * W
    L = xf_ref.shape[2]            # (H+2)*W + 2

    w2 = w_ref[...]                # (2C, 9C)
    b2 = b_ref[...]                # (2C, 1), broadcasts over lanes

    # Slab-level W-boundary masks, shared by every tap and every image:
    # padded column of slab index i is (i - 1) mod W; taps with dx = -1 must
    # drop sources at column W-1 (wrap from previous row), taps with dx = +1
    # must drop sources at column 0.  Guard elements fold onto already-zero
    # padding, so masking the whole slab once is exact.
    slab_col = (lax.broadcasted_iota(jnp.int32, (C, L), 1) + (W - 1)) % W
    keep_dxm1 = slab_col != (W - 1)
    keep_dxp1 = slab_col != 0

    # Gather the 9 taps of every image: taps -> sublanes, images -> lanes.
    tap_rows = [[] for _ in range(9)]
    for n in range(nb):
        xf = xf_ref[n]                                   # (C, L)
        src = {
            -1: jnp.where(keep_dxm1, xf, 0.0),
            0: xf,
            1: jnp.where(keep_dxp1, xf, 0.0),
        }
        t = 0
        for dy in (-1, 0, 1):
            for dx in (-1, 0, 1):
                s = 1 + (dy + 1) * W + dx
                tap_rows[t].append(src[dx][:, s:s + HW])  # (C, HW)
                t += 1

    # (C, nb*HW) per tap; HW is a multiple of 128 so lane concat is clean.
    taps = [jnp.concatenate(rows, axis=1) for rows in tap_rows]

    # im2col patch matrix and a single fused scale+shift matmul per grid step.
    patches = jnp.concatenate(taps, axis=0)              # (9C, nb*HW)
    act = jnp.dot(w2, patches, preferred_element_type=jnp.float32) + b2
    act = jnp.where(act >= 0, act, 0.1 * act)            # leaky_relu(0.1)

    x_all = taps[4]                                      # centre tap == x
    out = x_all * act[:C] + act[C:]                      # (C, nb*HW)

    for n in range(nb):
        o_ref[n] = out[:, n * HW:(n + 1) * HW].astype(o_ref.dtype)


def _pick_batch_block(n_batch, bytes_per_image, target_bytes=512 * 1024):
    """Largest divisor of n_batch keeping >=2 grid steps (v7x megacore) and
    moving at most ~target_bytes per step."""
    best = 1
    for nb in range(1, n_batch + 1):
        if n_batch % nb:
            continue
        if n_batch >= 2 and n_batch // nb < 2:
            continue
        if nb * bytes_per_image <= target_bytes:
            best = nb
    return best


def sft_block(x, w_scale, b_scale, w_shift, b_shift):
    """SFTBlock forward. x: (N, C, H, W) NCHW; weights OIHW (C, C, 3, 3)."""
    N, C, H, W = x.shape
    HW = H * W
    L = (H + 2) * W + 2

    # H-pad, flatten spatial, add a 1-element guard at each end so every conv
    # tap becomes a contiguous lane slice. All contiguous reshapes/cheap pads;
    # no NCHW <-> NHWC transpose passes.
    x_flat = jnp.pad(
        jnp.pad(x, ((0, 0), (0, 0), (1, 1), (0, 0))).reshape(N, C, (H + 2) * W),
        ((0, 0), (0, 0), (1, 1)))

    # Fuse scale/shift convolutions: rows [scale; shift], columns ordered
    # (ky, kx, c_in) to match the patch-matrix row order in the kernel.
    def _w2d(w):  # OIHW -> (C_out, 9*C_in)
        return jnp.transpose(w, (0, 2, 3, 1)).reshape(w.shape[0], -1)

    w_cat = jnp.concatenate([_w2d(w_scale), _w2d(w_shift)], axis=0)   # (2C, 9C)
    b_cat = jnp.concatenate([b_scale, b_shift]).reshape(2 * C, 1)     # (2C, 1)

    nb = _pick_batch_block(N, bytes_per_image=x.dtype.itemsize * C * (L + HW))
    grid = (N // nb,)

    # TODO(synk): for production H*W, tile the spatial axis (halo rows) and set
    # vmem_limit_bytes so whole-image blocks stay under v7x's 64 MiB VMEM.
    # TODO(synk): at production channel counts, feed bf16 patches/weights to the
    # MXU (f32 accumulate); kept f32 here since C=4 and the tolerance is tight.
    out_flat = pl.pallas_call(
        functools.partial(_sft_kernel, nb=nb, H=H, W=W),
        out_shape=jax.ShapeDtypeStruct((N, C, HW), x.dtype),
        grid_spec=pltpu.PrefetchScalarGridSpec(
            num_scalar_prefetch=0,
            grid=grid,
            in_specs=[
                pl.BlockSpec((nb, C, L), lambda i: (i, 0, 0)),
                pl.BlockSpec((2 * C, 9 * C), lambda i: (0, 0)),
                pl.BlockSpec((2 * C, 1), lambda i: (0, 0)),
            ],
            out_specs=pl.BlockSpec((nb, C, HW), lambda i: (i, 0, 0)),
        ),
        compiler_params=pltpu.CompilerParams(
            dimension_semantics=("parallel",)),
    )(x_flat, w_cat, b_cat)

    return out_flat.reshape(N, C, H, W)


def _reference(x, w_scale, b_scale, w_shift, b_shift):
    """Pure-JAX reference (lax conv, NCHW/OIHW) for correctness check."""
    dn = lax.conv_dimension_numbers(x.shape, w_scale.shape,
                                    ("NCHW", "OIHW", "NCHW"))

    def branch(w, b):
        y = lax.conv_general_dilated(x, w, (1, 1), "SAME",
                                     dimension_numbers=dn)
        y = y + b[None, :, None, None]
        return jnp.where(y >= 0, y, 0.1 * y)

    return x * branch(w_scale, b_scale) + branch(w_shift, b_shift)


if __name__ == "__main__":
    key = jax.random.PRNGKey(0)
    N, C, H, W = 2, 4, 16, 16

    k = jax.random.split(key, 5)
    x = jax.random.normal(k[0], (N, C, H, W), jnp.float32)   # NCHW, like PyTorch

    # nn.Conv2d(C, C, 3) default init ranges.
    fan_in = C * 3 * 3
    bound = 1.0 / (fan_in ** 0.5)
    w_scale = jax.random.uniform(k[1], (C, C, 3, 3), jnp.float32, -bound, bound)
    b_scale = jax.random.uniform(k[2], (C,), jnp.float32, -bound, bound)
    w_shift = jax.random.uniform(k[3], (C, C, 3, 3), jnp.float32, -bound, bound)
    b_shift = jax.random.uniform(k[4], (C,), jnp.float32, -bound, bound)

    out = sft_block(x, w_scale, b_scale, w_shift, b_shift)
    out = jax.block_until_ready(out)

    ref = _reference(x, w_scale, b_scale, w_shift, b_shift)
    assert out.shape == ref.shape
    assert jnp.allclose(out, ref, atol=1e-4, rtol=1e-4), "mismatch vs reference"

    print("KERNEL_OK")
</pallas_src>

<mosaic_0001>
module attributes {stable_mosaic.version = 11 : i64} {
  func.func @_sft_kernel(%arg0: i32, %arg1: memref<1x4x290xf32, #tpu.memory_space<vmem>>, %arg2: memref<8x36xf32, #tpu.memory_space<vmem>>, %arg3: memref<8x1xf32, #tpu.memory_space<vmem>>, %arg4: memref<1x4x256xf32, #tpu.memory_space<vmem>>) attributes {dimension_semantics = [#tpu.dimension_semantics<parallel>], iteration_bounds = array<i64: 2>, scalar_prefetch = 0 : i64, scratch_operands = 0 : i64, tpu.core_type = #tpu.core_type<tc>, window_params = [{transform_indices = @transform_0, window_bounds = array<i64: 1, 4, 290>}, {pipeline_mode = #tpu.pipeline_mode<synchronous>, transform_indices = @transform_1, window_bounds = array<i64: 8, 36>}, {pipeline_mode = #tpu.pipeline_mode<synchronous>, transform_indices = @transform_2, window_bounds = array<i64: 8, 1>}, {transform_indices = @transform_3, window_bounds = array<i64: 1, 4, 256>}]} {
    %c0 = arith.constant 0 : index
    %c0_0 = arith.constant 0 : index
    %0 = vector.load %arg2[%c0, %c0_0] : memref<8x36xf32, #tpu.memory_space<vmem>>, vector<8x36xf32>
    %c0_1 = arith.constant 0 : index
    %c0_2 = arith.constant 0 : index
    %1 = vector.load %arg3[%c0_1, %c0_2] : memref<8x1xf32, #tpu.memory_space<vmem>>, vector<8x1xf32>
    %2 = tpu.iota {dimensions = array<i32: 1>} : vector<4x290xi32>
    %c15_i32 = arith.constant 15 : i32
    %3 = vector.broadcast %c15_i32 : i32 to vector<4x290xi32>
    %4 = arith.addi %2, %3 : vector<4x290xi32>
    %c16_i32 = arith.constant 16 : i32
    %c0_i32 = arith.constant 0 : i32
    %5 = arith.cmpi eq, %c16_i32, %c0_i32 : i32
    %c1_i32 = arith.constant 1 : i32
    %6 = arith.select %5, %c1_i32, %c16_i32 : i32
    %7 = vector.broadcast %6 : i32 to vector<4x290xi32>
    %8 = arith.remsi %4, %7 : vector<4x290xi32>
    %c0_i32_3 = arith.constant 0 : i32
    %9 = vector.broadcast %c0_i32_3 : i32 to vector<4x290xi32>
    %10 = arith.cmpi ne, %8, %9 : vector<4x290xi32>
    %c0_i32_4 = arith.constant 0 : i32
    %11 = vector.broadcast %c0_i32_4 : i32 to vector<4x290xi32>
    %12 = arith.cmpi slt, %8, %11 : vector<4x290xi32>
    %c0_i32_5 = arith.constant 0 : i32
    %13 = arith.cmpi slt, %6, %c0_i32_5 : i32
    %14 = vector.broadcast %13 : i1 to vector<4x290xi1>
    %15 = vector.broadcast %14 : vector<4x290xi1> to vector<4x290xi1>
    %16 = arith.xori %12, %15 : vector<4x290xi1>
    %17 = arith.andi %16, %10 : vector<4x290xi1>
    %18 = vector.broadcast %6 : i32 to vector<4x290xi32>
    %19 = arith.addi %8, %18 : vector<4x290xi32>
    %20 = arith.select %17, %19, %8 : vector<4x290xi1>, vector<4x290xi32>
    %c15_i32_6 = arith.constant 15 : i32
    %21 = vector.broadcast %c15_i32_6 : i32 to vector<4x290xi32>
    %22 = arith.cmpi ne, %20, %21 : vector<4x290xi32>
    %c0_i32_7 = arith.constant 0 : i32
    %23 = vector.broadcast %c0_i32_7 : i32 to vector<4x290xi32>
    %24 = arith.cmpi ne, %20, %23 : vector<4x290xi32>
    %c0_8 = arith.constant 0 : index
    %c0_9 = arith.constant 0 : index
    %c0_10 = arith.constant 0 : index
    %25 = vector.load %arg1[%c0_8, %c0_9, %c0_10] : memref<1x4x290xf32, #tpu.memory_space<vmem>>, vector<1x4x290xf32>
    %26 = vector.shape_cast %25 : vector<1x4x290xf32> to vector<4x290xf32>
    %cst = arith.constant 0.000000e+00 : f32
    %27 = vector.broadcast %cst : f32 to vector<4x290xf32>
    %28 = arith.select %22, %26, %27 : vector<4x290xi1>, vector<4x290xf32>
    %cst_11 = arith.constant 0.000000e+00 : f32
    %29 = vector.broadcast %cst_11 : f32 to vector<4x290xf32>
    %30 = arith.select %24, %26, %29 : vector<4x290xi1>, vector<4x290xf32>
    %31 = vector.extract_strided_slice %28 {offsets = [0, 0], sizes = [4, 256], strides = [1, 1]} : vector<4x290xf32> to vector<4x256xf32>
    %32 = vector.extract_strided_slice %26 {offsets = [0, 1], sizes = [4, 256], strides = [1, 1]} : vector<4x290xf32> to vector<4x256xf32>
    %33 = vector.extract_strided_slice %30 {offsets = [0, 2], sizes = [4, 256], strides = [1, 1]} : vector<4x290xf32> to vector<4x256xf32>
    %34 = vector.extract_strided_slice %28 {offsets = [0, 16], sizes = [4, 256], strides = [1, 1]} : vector<4x290xf32> to vector<4x256xf32>
    %35 = vector.extract_strided_slice %26 {offsets = [0, 17], sizes = [4, 256], strides = [1, 1]} : vector<4x290xf32> to vector<4x256xf32>
    %36 = vector.extract_strided_slice %30 {offsets = [0, 18], sizes = [4, 256], strides = [1, 1]} : vector<4x290xf32> to vector<4x256xf32>
    %37 = vector.extract_strided_slice %28 {offsets = [0, 32], sizes = [4, 256], strides = [1, 1]} : vector<4x290xf32> to vector<4x256xf32>
    %38 = vector.extract_strided_slice %26 {offsets = [0, 33], sizes = [4, 256], strides = [1, 1]} : vector<4x290xf32> to vector<4x256xf32>
    %39 = vector.extract_strided_slice %30 {offsets = [0, 34], sizes = [4, 256], strides = [1, 1]} : vector<4x290xf32> to vector<4x256xf32>
    %40 = tpu.concatenate %31, %32, %33, %34, %35, %36, %37, %38, %39 in 0 : vector<4x256xf32>, vector<4x256xf32>, vector<4x256xf32>, vector<4x256xf32>, vector<4x256xf32>, vector<4x256xf32>, vector<4x256xf32>, vector<4x256xf32>, vector<4x256xf32> -> vector<36x256xf32>
    %cst_12 = arith.constant dense<0.000000e+00> : vector<8x256xf32>
    %41 = tpu.matmul %0, %40, %cst_12 {dimension_numbers = #tpu.dot_dimension_numbers<[1], [0], [0], [1], [0, 0, 1, 1], [], []>} : vector<8x36xf32>, vector<36x256xf32>, vector<8x256xf32> -> vector<8x256xf32>
    %42 = vector.broadcast %1 : vector<8x1xf32> to vector<8x256xf32>
    %43 = arith.addf %41, %42 : vector<8x256xf32>
    %cst_13 = arith.constant 0.000000e+00 : f32
    %44 = vector.broadcast %cst_13 : f32 to vector<8x256xf32>
    %45 = arith.cmpf oge, %43, %44 : vector<8x256xf32>
    %cst_14 = arith.constant 1.000000e-01 : f32
    %46 = vector.broadcast %cst_14 : f32 to vector<8x256xf32>
    %47 = arith.mulf %46, %43 : vector<8x256xf32>
    %48 = arith.select %45, %43, %47 : vector<8x256xi1>, vector<8x256xf32>
    %49 = vector.extract_strided_slice %48 {offsets = [0, 0], sizes = [4, 256], strides = [1, 1]} : vector<8x256xf32> to vector<4x256xf32>
    %50 = arith.mulf %35, %49 : vector<4x256xf32>
    %51 = vector.extract_strided_slice %48 {offsets = [4, 0], sizes = [4, 256], strides = [1, 1]} : vector<8x256xf32> to vector<4x256xf32>
    %52 = arith.addf %50, %51 : vector<4x256xf32>
    %c0_15 = arith.constant 0 : index
    %c0_16 = arith.constant 0 : index
    %c0_17 = arith.constant 0 : index
    %53 = vector.load %arg4[%c0_15, %c0_16, %c0_17] : memref<1x4x256xf32, #tpu.memory_space<vmem>>, vector<1x4x256xf32>
    %54 = vector.shape_cast %53 : vector<1x4x256xf32> to vector<4x256xf32>
    %55 = vector.shape_cast %52 : vector<4x256xf32> to vector<1x4x256xf32>
    tpu.vector_store %arg4[%c0_15, %c0_16, %c0_17], %55 {strides = array<i32>} : memref<1x4x256xf32, #tpu.memory_space<vmem>>, vector<1x4x256xf32>,
    return
  }
  func.func @transform_0(%arg0: i32) -> (i32, i32, i32) {
    %c0_i32 = arith.constant 0 : i32
    %c0_i32_0 = arith.constant 0 : i32
    %c0_i32_1 = arith.constant 0 : i32
    return %arg0, %c0_i32, %c0_i32_0 : i32, i32, i32
  }
  func.func @transform_1(%arg0: i32) -> (i32, i32) {
    %c0_i32 = arith.constant 0 : i32
    %c0_i32_0 = arith.constant 0 : i32
    %c0_i32_1 = arith.constant 0 : i32
    return %c0_i32, %c0_i32_0 : i32, i32
  }
  func.func @transform_2(%arg0: i32) -> (i32, i32) {
    %c0_i32 = arith.constant 0 : i32
    %c0_i32_0 = arith.constant 0 : i32
    %c0_i32_1 = arith.constant 0 : i32
    return %c0_i32, %c0_i32_0 : i32, i32
  }
  func.func @transform_3(%arg0: i32) -> (i32, i32, i32) {
    %c0_i32 = arith.constant 0 : i32
    %c0_i32_0 = arith.constant 0 : i32
    %c0_i32_1 = arith.constant 0 : i32
    return %arg0, %c0_i32, %c0_i32_0 : i32, i32, i32
  }
}

</mosaic_0001>

<llo_original>
// kernel: tpu_custom_call.1
$region0: #{tpu_custom_call.1}
  #allocation0 [shape = 'u32[]', space=smem, size = 0x4, offset = 0x4, fixed_abs, tag = 'smem constant byte address 0x4 - core index']
  #allocation1 [shape = 'u32[144,128]{1,0:T(1,128)}', space=vmem, size = 0x12000, scoped, tag = 'internal scratch']
  %s0 = inlined_call_operand.hbm [shape: f32[2,4,290], index: 0, kind: input, shape index: {}]
  %s1 = inlined_call_operand.vmem [shape: f32[8,36], index: 1, kind: input, shape index: {}]
  %s2 = inlined_call_operand.vmem [shape: f32[8,1], index: 2, kind: input, shape index: {}]
  %s3 = inlined_call_operand.hbm [shape: f32[2,4,256], index: 3, kind: output, shape index: {}]
  %s4 = sld [smem:[#allocation0]]
  $region49: #{tpu_custom_call.1} parent=0
    _
  %s6 = ssub.s32 1, %s4
  %s7 = scalar_select 0, %s6, %s4
  $region1: #{tpu_custom_call.1} parent=0
    #allocation2 [shape = 'u8[12288]{0}', space=vmem, size = 0x3000, scoped, tag = 'input window, operand 0']
    #allocation3 [shape = 's32[2]{0}', space=sflag, size = 0x8, scoped, tag = 'scoped memory for tpu_custom_call.1']
    #allocation4 [shape = 's32[2]{0}', space=sflag, size = 0x8, scoped, tag = 'scoped memory for tpu_custom_call.1']
    #allocation5 [shape = 'u8[8192]{0}', space=vmem, size = 0x2000, scoped, tag = 'output window, operand 0']
    %8 = vsyncpa [#allocation3], 0
    %s9 = scalar_lea.sflag [#allocation3], 1
    %10 = vsyncpa %s9, 0
    %11 = vsyncpa [#allocation4], 0
    %s12 = scalar_lea.sflag [#allocation4], 1
    %13 = vsyncpa %s12, 0
    loop: start=0, step=1, limit=4
    $region2: #{tpu_custom_call.1} parent=1 // loop_pre_header
      _
    $region3: #{tpu_custom_call.1} parent=1 // loop_header
      %s15 = sphi 0, %s19
      %p16 = scmp.ge.s32.totalorder %s15, 4
      %s25 = sphi 0, %s27
      %s28 = sphi 0, %s25
      %s29 = sphi 0, %s28
      %s45 = sphi 0, %s29
      %s49 = sphi 0, %s49
      %s51 = sphi 0, %s49
      %s52 = sphi 0, %s51
      %s66 = sphi 0, %s52
      %s70 = sphi 0, %s70
      %s72 = sphi 0, %s70
      %s73 = sphi 0, %s72
      %s87 = sphi 0, %s73
      %s93 = sphi 0, %s95
      %s96 = sphi 0, %s93
      %s97 = sphi 0, %s96
      %s113 = sphi 0, %s97
    $region4: #{tpu_custom_call.1} parent=1 // loop_header_branch
      %18 = sbr.rel (%p16) target = $region8
    $region5: #{tpu_custom_call.1} parent=1 // loop_body
      %s20 = ssub.s32 %s15, 1
      %s21 = ssub.s32 %s15, 2
      %s22 = sadd.s32 %s15, 1
      %s23 = ssub.s32 %s15, %s22
      %p24 = scmp.eq.s32.totalorder %s23, 0
      %s26 = sadd.s32 %s25, 1
      %s27 = scalar_select %p24, %s25, %s26
      %p30 = pneg %p24
      %p31 = scmp.eq.s32.totalorder %s15, 1
      %p32 = por %p30, %p31
      %p33 = scmp.ne.s32.totalorder %s25, %s28
      %p34 = scmp.eq.s32.totalorder %s15, 0
      %p35 = por %p33, %p34
      %p36 = scmp.ne.s32.totalorder %s25, %s28
      %p37 = scmp.eq.s32.totalorder %s20, 1
      %p38 = por %p36, %p37
      %p39 = scmp.ne.s32.totalorder %s28, %s29
      %p40 = scmp.eq.s32.totalorder %s20, 0
      %p41 = por %p39, %p40
      %p42 = scmp.ne.s32.totalorder %s28, %s29
      %p43 = scmp.eq.s32.totalorder %s21, 1
      %p44 = por %p42, %p43
      %p46 = scmp.ne.s32.totalorder %s29, %s45
      %p47 = scmp.eq.s32.totalorder %s21, 0
      %p48 = por %p46, %p47
      %s50 = sadd.s32 %s49, 1
      %p53 = scmp.eq.s32.totalorder %s15, 1
      %p54 = scmp.ne.s32.totalorder %s49, %s51
      %p55 = scmp.eq.s32.totalorder %s15, 0
      %p56 = por %p54, %p55
      %p57 = scmp.ne.s32.totalorder %s49, %s51
      %p58 = scmp.eq.s32.totalorder %s20, 1
      %p59 = por %p57, %p58
      %p60 = scmp.ne.s32.totalorder %s51, %s52
      %p61 = scmp.eq.s32.totalorder %s20, 0
      %p62 = por %p60, %p61
      %p63 = scmp.ne.s32.totalorder %s51, %s52
      %p64 = scmp.eq.s32.totalorder %s21, 1
      %p65 = por %p63, %p64
      %p67 = scmp.ne.s32.totalorder %s52, %s66
      %p68 = scmp.eq.s32.totalorder %s21, 0
      %p69 = por %p67, %p68
      %s71 = sadd.s32 %s70, 1
      %p74 = scmp.eq.s32.totalorder %s15, 1
      %p75 = scmp.ne.s32.totalorder %s70, %s72
      %p76 = scmp.eq.s32.totalorder %s15, 0
      %p77 = por %p75, %p76
      %p78 = scmp.ne.s32.totalorder %s70, %s72
      %p79 = scmp.eq.s32.totalorder %s20, 1
      %p80 = por %p78, %p79
      %p81 = scmp.ne.s32.totalorder %s72, %s73
      %p82 = scmp.eq.s32.totalorder %s20, 0
      %p83 = por %p81, %p82
      %p84 = scmp.ne.s32.totalorder %s72, %s73
      %p85 = scmp.eq.s32.totalorder %s21, 1
      %p86 = por %p84, %p85
      %p88 = scmp.ne.s32.totalorder %s73, %s87
      %p89 = scmp.eq.s32.totalorder %s21, 0
      %p90 = por %p88, %p89
      %s91 = ssub.s32 %s15, %s22
      %p92 = scmp.eq.s32.totalorder %s91, 0
      %s94 = sadd.s32 %s93, 1
      %s95 = scalar_select %p92, %s93, %s94
      %p98 = pneg %p92
      %p99 = scmp.eq.s32.totalorder %s15, 1
      %p100 = por %p98, %p99
      %p101 = scmp.ne.s32.totalorder %s93, %s96
      %p102 = scmp.eq.s32.totalorder %s15, 0
      %p103 = por %p101, %p102
      %p104 = scmp.ne.s32.totalorder %s93, %s96
      %p105 = scmp.eq.s32.totalorder %s20, 1
      %p106 = por %p104, %p105
      %p107 = scmp.ne.s32.totalorder %s96, %s97
      %p108 = scmp.eq.s32.totalorder %s20, 0
      %p109 = por %p107, %p108
      %p110 = scmp.ne.s32.totalorder %s96, %s97
      %p111 = scmp.eq.s32.totalorder %s21, 1
      %p112 = por %p110, %p111
      %p114 = scmp.ne.s32.totalorder %s97, %s113
      %p115 = scmp.eq.s32.totalorder %s21, 0
      %p116 = por %p114, %p115
      %p117 = scmp.le.s32.totalorder 1, %s15
      %p118 = scmp.lt.s32.totalorder %s15, 3
      %p119 = pnand %p117, %p118
      %p120 = pneg %p119
      // Predicated region
      $region9: #{tpu_custom_call.1} parent=5 // pred_check
        _
      $region10: #{tpu_custom_call.1} parent=5 // pred_check_branch
        %122 = sbr.rel (%p119) target = $region12
      $region11: #{tpu_custom_call.1} parent=5 // pred_region
        %s123 = ssub.s32 %s15, 1
        // Predicated region
        $region13: #{tpu_custom_call.1} parent=11 // pred_check
          %p124 = pneg %p62
        $region14: #{tpu_custom_call.1} parent=11 // pred_check_branch
          %126 = sbr.rel (%p124) target = $region16
        $region15: #{tpu_custom_call.1} parent=11 // pred_region
          _
        $region16: #{tpu_custom_call.1} parent=11 // pred_fallthru
          _
        // Predicated region
        $region17: #{tpu_custom_call.1} parent=11 // pred_check
          %p127 = pneg %p83
        $region18: #{tpu_custom_call.1} parent=11 // pred_check_branch
          %129 = sbr.rel (%p127) target = $region20
        $region19: #{tpu_custom_call.1} parent=11 // pred_region
          _
        $region20: #{tpu_custom_call.1} parent=11 // pred_fallthru
          _
      $region12: #{tpu_custom_call.1} parent=5 // pred_fallthru
        _
      %p130 = scmp.lt.s32.totalorder %s15, 2
      // Predicated region
      $region21: #{tpu_custom_call.1} parent=5 // pred_check
        %p131 = pneg %p130
      $region22: #{tpu_custom_call.1} parent=5 // pred_check_branch
        %133 = sbr.rel (%p131) target = $region24
      $region23: #{tpu_custom_call.1} parent=5 // pred_region
        // Predicated region
        $region25: #{tpu_custom_call.1} parent=23 // pred_check
          %p134 = pneg %p35
        $region26: #{tpu_custom_call.1} parent=23 // pred_check_branch
          %136 = sbr.rel (%p134) target = $region28
        $region27: #{tpu_custom_call.1} parent=23 // pred_region
          %s137 = sand.u32 %s25, 1
          %s138 = scalar_lea.sflag [#allocation3], %s137
          %s139 = sand.u32 %s25, 1
          %s140 = smul.addr %s139, 12
          %s141 = scalar_lea.vmem [#allocation2], %s140
          %s143 = ssub.s32 192, 192
          %144 = vsyncadd %s138, %s143
          %s145 = smul.addr %s15, 3
          %s146 = smul.addr %s145, 64
          %s147 = scalar_lea.hbm %s0, %s146
          %s149 = sshll.u32 %s141, 4
          %s150 = int_to_ptr.vmem [resolvable:$true] %s149
          %152 = dma.hbm_to_vmem [thread:$0]  %s147, 192, %s150, %s138
        $region28: #{tpu_custom_call.1} parent=23 // pred_fallthru
          _
      $region24: #{tpu_custom_call.1} parent=5 // pred_fallthru
        _
      %p153 = scmp.le.s32.totalorder 1, %s15
      %p154 = scmp.lt.s32.totalorder %s15, 3
      %p155 = pnand %p153, %p154
      %p156 = pneg %p155
      // Predicated region
      $region29: #{tpu_custom_call.1} parent=5 // pred_check
        _
      $region30: #{tpu_custom_call.1} parent=5 // pred_check_branch
        %158 = sbr.rel (%p155) target = $region32
      $region31: #{tpu_custom_call.1} parent=5 // pred_region
        %s159 = ssub.s32 %s15, 1
        %s160 = sand.u32 %s28, 1
        %s161 = scalar_lea.sflag [#allocation3], %s160
        %s162 = sand.u32 %s28, 1
        %s163 = smul.addr %s162, 12
        %s164 = scalar_lea.vmem [#allocation2], %s163
        // Predicated region
        $region33: #{tpu_custom_call.1} parent=31 // pred_check
          %p165 = pneg %p41
        $region34: #{tpu_custom_call.1} parent=31 // pred_check_branch
          %167 = sbr.rel (%p165) target = $region36
        $region35: #{tpu_custom_call.1} parent=31 // pred_region
          %168 = dma.done %s161, 192
        $region36: #{tpu_custom_call.1} parent=31 // pred_fallthru
          _
        %s169 = sand.u32 %s28, 1
        %s170 = scalar_lea.sflag [#allocation3], %s169
        %s171 = sand.u32 %s28, 1
        %s172 = smul.addr %s171, 12
        %s173 = scalar_lea.vmem [#allocation2], %s172
        %p174 = pneg %p41
        %p175 = pneg %p38
        %p176 = pneg %p62
        %p177 = pneg %p59
        %p178 = pneg %p83
        %p179 = pneg %p80
        %p180 = pneg %p109
        %p181 = pneg %p106
        %s182 = sand.u32 %s96, 1
        %s183 = scalar_lea.sflag [#allocation4], %s182
        %s184 = sand.u32 %s96, 1
        %s185 = smul.addr %s184, 8
        %s186 = scalar_lea.vmem [#allocation5], %s185
        %v187 = vld [vmem:[%s1] sm:$0xff]
        %v188 = vld [vmem:[%s2] sm:$0xff]
        %v189 = vlaneseq
        %v190 = vand.u32 %v189, 127
        %v191 = vadd.s32 %v190, 128
        %v192 = vadd.s32 %v190, 256
        %v193 = vadd.s32 %v190, 15
        %v194 = vadd.s32 %v191, 15
        %v195 = vadd.s32 %v192, 15
        %vm196 = vcmp.lt.s32.totalorder %v193, 0
        %v197 = vsub.s32 0, %v193
        %v198 = vsel %vm196, %v197, %v193
        %v199 = vshrl.u32 %v198, 4
        %v200 = vand.u32 %v198, 15
        %v201 = vsub.s32 0, %v200
        %v202 = vsel %vm196, %v201, %v200
        %vm203 = vcmp.lt.s32.totalorder %v194, 0
        %v204 = vsub.s32 0, %v194
        %v205 = vsel %vm203, %v204, %v194
        %v206 = vshrl.u32 %v205, 4
        %v207 = vand.u32 %v205, 15
        %v208 = vsub.s32 0, %v207
        %v209 = vsel %vm203, %v208, %v207
        %vm210 = vcmp.lt.s32.totalorder %v195, 0
        %v211 = vsub.s32 0, %v195
        %v212 = vsel %vm210, %v211, %v195
        %v213 = vshrl.u32 %v212, 4
        %v214 = vand.u32 %v212, 15
        %v215 = vsub.s32 0, %v214
        %v216 = vsel %vm210, %v215, %v214
        %vm217 = vcmp.ne.s32.totalorder %v202, 0
        %vm218 = vcmp.ne.s32.totalorder %v209, 0
        %vm219 = vcmp.ne.s32.totalorder %v216, 0
        %vm220 = vcmp.lt.s32.totalorder %v202, 0
        %vm221 = vcmp.lt.s32.totalorder %v209, 0
        %vm222 = vcmp.lt.s32.totalorder %v216, 0
        %vm223 = vmand %vm220, %vm217
        %vm224 = vmand %vm221, %vm218
        %vm225 = vmand %vm222, %vm219
        %v226 = vadd.s32 %v202, 16
        %v227 = vadd.s32 %v209, 16
        %v228 = vadd.s32 %v216, 16
        %v229 = vsel %vm223, %v226, %v202
        %v230 = vsel %vm224, %v227, %v209
        %v231 = vsel %vm225, %v228, %v216
        %vm232 = vcmp.ne.s32.totalorder %v229, 15
        %vm233 = vcmp.ne.s32.totalorder %v230, 15
        %vm234 = vcmp.ne.s32.totalorder %v231, 15
        %vm235 = vcmp.ne.s32.totalorder %v229, 0
        %vm236 = vcmp.ne.s32.totalorder %v230, 0
        %vm237 = vcmp.ne.s32.totalorder %v231, 0
        %v238 = vld [vmem:[%s164] sm:$0xff]
        %v239 = vld [vmem:[%s164 + $0x8] sm:$0xf]
        %v242 = vcombine.high %v238, %v238
        %v244 = vsel %vm232, %v238, 0.0
        %v245 = vsel %vm233, %v242, 0.0
        %v246 = vsel %vm234, %v239, 0.0
        %v247 = vsel %vm235, %v238, 0.0
        %v248 = vsel %vm236, %v242, 0.0
        %v249 = vsel %vm237, %v239, 0.0
        %v250 = vcombine.low %v238, %v238
        %v251 = vcombine.low %v239, %v239
        %252 = vrot.lane.b32.xlu0 %v250, 127
        %v253 = vpop.permute.xlu0 %252
        %254 = vrot.lane.b32.xlu0 %v238, 127
        %v255 = vpop.permute.xlu0 %254
        %256 = vrot.lane.b32.xlu0 %v251, 127
        %v257 = vpop.permute.xlu0 %256
        %vm258 = vcmask 1039360
        %v259 = vsel %vm258, %v253, %v255
        %v260 = vsel %vm258, %v255, %v257
        %266 = vrot.lane.b32.xlu0 %v247, 126
        %v267 = vpop.permute.xlu0 %266
        %268 = vrot.lane.b32.xlu0 %v248, 126
        %v269 = vpop.permute.xlu0 %268
        %270 = vrot.lane.b32.xlu0 %v249, 126
        %v271 = vpop.permute.xlu0 %270
        %vm272 = vcmask 1031168
        %v273 = vsel %vm272, %v267, %v269
        %v274 = vsel %vm272, %v269, %v271
        %v280 = vrot.slane %v244, 4
        %v281 = vrot.slane %v245, 4
        %v282 = vrot.slane %v246, 4
        %283 = vrot.lane.b32.xlu0 %v280, 112
        %v284 = vpop.permute.xlu0 %283
        %285 = vrot.lane.b32.xlu0 %v281, 112
        %v286 = vpop.permute.xlu0 %285
        %287 = vrot.lane.b32.xlu0 %v282, 112
        %v288 = vpop.permute.xlu0 %287
        %vm289 = vcmask 916480
        %v290 = vsel %vm289, %v284, %v286
        %v291 = vsel %vm289, %v286, %v288
        %294 = vrot.lane.b32.xlu0 %v238, 111
        %v295 = vpop.permute.xlu0 %294
        %296 = vrot.lane.b32.xlu0 %v242, 111
        %v297 = vpop.permute.xlu0 %296
        %298 = vrot.lane.b32.xlu0 %v239, 111
        %v299 = vpop.permute.xlu0 %298
        %vm300 = vcmask 908288
        %v301 = vsel %vm300, %v295, %v297
        %v302 = vsel %vm300, %v297, %v299
        %v305 = vrot.slane %v247, 4
        %v306 = vrot.slane %v248, 4
        %v307 = vrot.slane %v249, 4
        %308 = vrot.lane.b32.xlu0 %v305, 110
        %v309 = vpop.permute.xlu0 %308
        %310 = vrot.lane.b32.xlu0 %v306, 110
        %v311 = vpop.permute.xlu0 %310
        %312 = vrot.lane.b32.xlu0 %v307, 110
        %v313 = vpop.permute.xlu0 %312
        %vm314 = vcmask 900096
        %v315 = vsel %vm314, %v309, %v311
        %v316 = vsel %vm314, %v311, %v313
        %319 = vrot.lane.b32.xlu0 %v244, 96
        %v320 = vpop.permute.xlu0 %319
        %321 = vrot.lane.b32.xlu0 %v245, 96
        %v322 = vpop.permute.xlu0 %321
        %323 = vrot.lane.b32.xlu0 %v246, 96
        %v324 = vpop.permute.xlu0 %323
        %vm325 = vcmask 785408
        %v326 = vsel %vm325, %v320, %v322
        %v327 = vsel %vm325, %v322, %v324
        %330 = vrot.lane.b32.xlu0 %v250, 95
        %v331 = vpop.permute.xlu0 %330
        %332 = vrot.lane.b32.xlu0 %v238, 95
        %v333 = vpop.permute.xlu0 %332
        %334 = vrot.lane.b32.xlu0 %v251, 95
        %v335 = vpop.permute.xlu0 %334
        %vm336 = vcmask 777216
        %v337 = vsel %vm336, %v331, %v333
        %v338 = vsel %vm336, %v333, %v335
        %341 = vrot.lane.b32.xlu0 %v247, 94
        %v342 = vpop.permute.xlu0 %341
        %343 = vrot.lane.b32.xlu0 %v248, 94
        %v344 = vpop.permute.xlu0 %343
        %345 = vrot.lane.b32.xlu0 %v249, 94
        %v346 = vpop.permute.xlu0 %345
        %vm347 = vcmask 769024
        %v348 = vsel %vm347, %v342, %v344
        %v349 = vsel %vm347, %v344, %v346
        %vm350 = vcmask 1043456
        %v351 = vsel %vm350, %v244, %v259
        %v352 = vsel %vm350, %v245, %v260
        %v353 = vsel %vm350, %v273, %v290
        %v354 = vsel %vm350, %v274, %v291
        %v355 = vsel %vm350, %v301, %v315
        %v356 = vsel %vm350, %v302, %v316
        %v357 = vsel %vm350, %v326, %v337
        %v358 = vsel %vm350, %v327, %v338
        %360 = vset.pattern.permute.xlu0 0
        %361 = vperm.xlu0 %360, %v188
        %v362 = vpop.permute.xlu0 %361
        %vm364 = vcmask 293888
        %v366 = vsel %vm364, %v187, 0
        %v368 = vsel %vm350, %v348, 0
        %v370 = vsel %vm350, %v349, 0
        %372 = vmatprep.subr.mxu0 %v352
        %373 = vmatpush1.msra.mxu0 %v351
        %374 = vmatprep.subr.mxu0 %v354
        %375 = vmatpush1.msra.mxu0 %v353
        %376 = vmatprep.subr.mxu0 %v356
        %377 = vmatpush1.msra.mxu0 %v355
        %378 = vmatprep.subr.mxu0 %v358
        %379 = vmatpush1.msra.mxu0 %v357
        %380 = vmatprep.subr.mxu0 %v370
        %381 = vmatpush1.msra.mxu0 %v368
        %382 = vmatprep.subr.mxu0 0.0
        %383 = vmatpush1.msra.mxu0 0.0
        %384 = vmatprep.subr.mxu0 0.0
        %385 = vmatpush1.msra.mxu0 0.0
        %386 = vmatprep.subr.mxu0 0.0
        %387 = vmatpush1.msra.mxu0 0.0
        %388 = vmatprep.subr.mxu0 0.0
        %389 = vmatpush1.msra.mxu0 0.0
        %390 = vmatprep.subr.mxu0 0.0
        %391 = vmatpush1.msra.mxu0 0.0
        %392 = vmatprep.subr.mxu0 0.0
        %393 = vmatpush1.msra.mxu0 0.0
        %394 = vmatprep.subr.mxu0 0.0
        %395 = vmatpush1.msra.mxu0 0.0
        %396 = vmatprep.subr.mxu0 0.0
        %397 = vmatpush1.msra.mxu0 0.0
        %398 = vmatprep.subr.mxu0 0.0
        %399 = vmatpush1.msra.mxu0 0.0
        %400 = vmatprep.subr.mxu0 0.0
        %401 = vmatpush1.msra.mxu0 0.0
        %402 = vmatprep.subr.mxu0 0.0
        %403 = vmatpush1.msra.mxu0 0.0
        %404 = vmatprep.subr.mxu0 0.0
        %405 = vmatpush1.msra.mxu0 0.0
        %406 = vmatprep.subr.mxu0 0.0
        %407 = vmatpush1.msra.mxu0 0.0
        %408 = vmatprep.subr.mxu0 0.0
        %409 = vmatpush1.msra.mxu0 0.0
        %410 = vmatprep.subr.mxu0 0.0
        %411 = vmatpush1.msra.mxu0 0.0
        %412 = vmatprep.subr.mxu0 0.0
        %413 = vmatpush1.msra.mxu0 0.0
        %414 = vmatprep.subr.mxu0 0.0
        %415 = vmatpush1.msra.mxu0 0.0
        %416 = vmatprep.subr.mxu0 0.0
        %417 = vmatpush1.msra.mxu0 0.0
        %418 = vmatprep.subr.mxu0 0.0
        %419 = vmatpush1.msra.mxu0 0.0
        %420 = vmatprep.subr.mxu0 0.0
        %421 = vmatpush1.msra.mxu0 0.0
        %422 = vmatprep.subr.mxu0 0.0
        %423 = vmatpush1.msra.mxu0 0.0
        %424 = vmatprep.subr.mxu0 0.0
        %425 = vmatpush1.msra.mxu0 0.0
        %426 = vmatprep.subr.mxu0 0.0
        %427 = vmatpush1.msra.mxu0 0.0
        %428 = vmatprep.subr.mxu0 0.0
        %429 = vmatpush1.msra.mxu0 0.0
        %430 = vmatprep.subr.mxu0 0.0
        %431 = vmatpush1.msra.mxu0 0.0
        %432 = vmatprep.subr.mxu0 0.0
        %433 = vmatpush1.msra.mxu0 0.0
        %434 = vmatprep.subr.mxu0 0.0
        %435 = vmatpush1.msra.mxu0 0.0
        %436 = vmatprep.mubr.f32.mxu0 0.0
        %437 = vmatmul.mubr.f32.gmra.mrb[0].mxu0 %v366
        %v438 = vpop.f32.mrb[0].mxu0
        %v439 = vadd.f32 %v362, %v438
        %v440 = vpop.f32.mrb[0].mxu0
        %v441 = vadd.f32 %v362, %v440
        %442 = vdwg.mxu0
        %vm443 = vcmp.ge.f32.partialorder %v439, 0.0
        %vm444 = vcmp.ge.f32.partialorder %v441, 0.0
        %v445 = vmul.f32 %v439, 0.1
        %v446 = vmul.f32 %v441, 0.1
        %v447 = vsel %vm443, %v439, %v445
        %v448 = vsel %vm444, %v441, %v446
        %v451 = vcombine.low %v447, %v448
        %452 = vrot.lane.b32.xlu0 %v451, 17
        %v453 = vpop.permute.xlu0 %452
        %v454 = vrot.slane %v453, 4
        %vm455 = vcmask 138240
        %v456 = vsel %vm455, %v454, %v453
        %v459 = vmul.f32 %v238, %v456
        %v460 = vmul.f32 %v239, %v454
        %v461 = vcombine.high %v447, %v448
        %462 = vrot.lane.b32.xlu0 %v461, 17
        %v463 = vpop.permute.xlu0 %462
        %v464 = vrot.slane %v463, 4
        %v465 = vsel %vm455, %v464, %v463
        %v468 = vadd.f32 %v459, %v465
        %v469 = vadd.f32 %v460, %v464
        %472 = vrot.lane.b32.xlu0 %v468, 111
        %v473 = vpop.permute.xlu0 %472
        %474 = vrot.lane.b32.xlu0 %v469, 111
        %v475 = vpop.permute.xlu0 %474
        %v476 = vrot.slane %v473, 4
        %v477 = vrot.slane %v475, 4
        %v478 = vsel %vm350, %v476, %v477
        %v479 = vsel %vm300, %v473, %v478
        %481 = vst [vmem:[%s186] sm:$0xff] %v479
        %s482 = sand.u32 %s96, 1
        %s483 = scalar_lea.sflag [#allocation4], %s482
        %s484 = sand.u32 %s96, 1
        %s485 = smul.addr %s484, 8
        %s486 = scalar_lea.vmem [#allocation5], %s485
        // Predicated region
        $region37: #{tpu_custom_call.1} parent=31 // pred_check
          %p487 = pneg %p106
        $region38: #{tpu_custom_call.1} parent=31 // pred_check_branch
          %489 = sbr.rel (%p487) target = $region40
        $region39: #{tpu_custom_call.1} parent=31 // pred_region
          %s491 = ssub.s32 128, 128
          %492 = vsyncadd %s483, %s491
          %s493 = smul.addr %s20, 2
          %s494 = smul.addr %s493, 64
          %s495 = scalar_lea.hbm %s3, %s494
          %s497 = sshll.u32 %s486, 4
          %s498 = int_to_ptr.vmem [resolvable:$true] %s497
          %500 = dma.vmem_to_hbm [thread:$0]  %s498, 128, %s495, %s483
        $region40: #{tpu_custom_call.1} parent=31 // pred_fallthru
          _
      $region32: #{tpu_custom_call.1} parent=5 // pred_fallthru
        _
      %p501 = scmp.le.s32.totalorder 2, %s15
      // Predicated region
      $region41: #{tpu_custom_call.1} parent=5 // pred_check
        %p502 = pneg %p501
      $region42: #{tpu_custom_call.1} parent=5 // pred_check_branch
        %504 = sbr.rel (%p502) target = $region44
      $region43: #{tpu_custom_call.1} parent=5 // pred_region
        %s505 = ssub.s32 %s15, 2
        // Predicated region
        $region45: #{tpu_custom_call.1} parent=43 // pred_check
          %p506 = pneg %p112
        $region46: #{tpu_custom_call.1} parent=43 // pred_check_branch
          %508 = sbr.rel (%p506) target = $region48
        $region47: #{tpu_custom_call.1} parent=43 // pred_region
          %s509 = sand.u32 %s97, 1
          %s510 = scalar_lea.sflag [#allocation4], %s509
          %s511 = sand.u32 %s97, 1
          %s512 = smul.addr %s511, 8
          %s513 = scalar_lea.vmem [#allocation5], %s512
          %514 = dma.done %s510, 128
        $region48: #{tpu_custom_call.1} parent=43 // pred_fallthru
          _
      $region44: #{tpu_custom_call.1} parent=5 // pred_fallthru
        _
    $region6: #{tpu_custom_call.1} parent=1 // loop_footer
      %s19 = sadd.s32 1, %s15
    $region7: #{tpu_custom_call.1} parent=1 // loop_footer_branch
      %14 = sbr.rel target = $region3
    $region8: #{tpu_custom_call.1} parent=1 // loop_exit
      _
    %515 = vsyncpa [#allocation3], 1
    %s516 = scalar_lea.sflag [#allocation3], 1
    %517 = vsyncpa %s516, 1
    %518 = vsyncpa [#allocation4], 1
    %s519 = scalar_lea.sflag [#allocation4], 1
    %520 = vsyncpa %s519, 1

</llo_original>
